<compile_context>
chip_gen: v6e
topology: v6e:2x2x1
jax: 0.10.0
libtpu: 0.0.40
codegen_flags: <defaults>
</compile_context>

<pallas_src>
import functools

import jax
import jax.numpy as jnp
from jax.experimental import pallas as pl
from jax.experimental.pallas import tpu as pltpu

_TARGET_BLOCK_BYTES = 2 << 20   # ~2 MiB per block (counted in f32 bytes)
_VMEM_LIMIT_BYTES = 48 << 20    # safe on v5e/v6e (128 MiB phys) and v7x (64 MiB)


def _fixednorm_kernel(x_ref, o_ref, *, dd):
    # x_ref: (tm, D) tile in VMEM. Accumulate / sqrt in f32.
    x = x_ref[...].astype(jnp.float32)
    sq_sum = jnp.sum(x * x, axis=-1, keepdims=True)      # (tm, 1), XLU reduce
    denom = jnp.sqrt(sq_sum) * dd + 1e-12                # (tm, 1)
    inv = 1.0 / denom                                    # per-row, exact (parity w/ ref)
    o_ref[...] = (x * inv).astype(o_ref.dtype)


def _pick_row_tile(m, d):
    """Pick a row tile that (a) keeps the f32 block near _TARGET_BLOCK_BYTES,
    (b) is a multiple of 8 (sublane tiling), and (c) divides the row count so
    no padding is needed whenever possible. Returns (row_tile, need_pad)."""
    target = max(8, (_TARGET_BLOCK_BYTES // (d * 4)) // 8 * 8)
    if m <= target:
        # Single full-extent block: legal regardless of (8,128) divisibility.
        return m, False
    if m % 8 == 0:
        for cand in range(min(target, (m // 8) * 8), 7, -8):
            if m % cand == 0:
                return cand, False
    # Rare ragged-row fallback: pad rows up to a multiple of the tile.
    return target, True


def fixed_norm(x):
    """FixedNorm over the last axis of x (any leading shape)."""
    d = x.shape[-1]
    dd = float(d) ** (-0.5)

    orig_shape = x.shape
    x2 = x.reshape(-1, d)          # (M, D)
    m = x2.shape[0]

    row_tile, need_pad = _pick_row_tile(m, d)
    if need_pad:
        m_pad = pl.cdiv(m, row_tile) * row_tile
        x2 = jnp.pad(x2, ((0, m_pad - m), (0, 0)))
    else:
        m_pad = m

    grid = (m_pad // row_tile,)

    # NOTE: when D < 128 the stores are masked (not lane-dense). Packing
    # 128//D rows per lane row would recover full store width but needs a
    # segmented lane reduction; production hidden sizes are >= 128, so the
    # simple row-major layout is kept here.
    out = pl.pallas_call(
        functools.partial(_fixednorm_kernel, dd=dd),
        out_shape=jax.ShapeDtypeStruct((m_pad, d), x.dtype),
        grid_spec=pltpu.PrefetchScalarGridSpec(
            num_scalar_prefetch=0,
            grid=grid,
            in_specs=[pl.BlockSpec((row_tile, d), lambda i: (i, 0))],
            out_specs=pl.BlockSpec((row_tile, d), lambda i: (i, 0)),
        ),
        compiler_params=pltpu.CompilerParams(
            dimension_semantics=("parallel",),
            vmem_limit_bytes=_VMEM_LIMIT_BYTES,
        ),
    )(x2)

    if need_pad:
        out = out[:m]
    return out.reshape(orig_shape)


def fixed_norm_ref(x):
    d = x.shape[-1]
    dd = float(d) ** (-0.5)
    xf = x.astype(jnp.float32)
    norm = jnp.sqrt(jnp.sum(xf * xf, axis=-1, keepdims=True))
    return (xf / (norm * dd + 1e-12)).astype(x.dtype)


if __name__ == "__main__":
    key = jax.random.PRNGKey(0)
    # FixedNorm(d=hidden) applied to (batch, seq, hidden) activations.
    batch, seq, hidden = 2, 8, 32
    x = jax.random.normal(key, (batch, seq, hidden), dtype=jnp.float32)

    y = fixed_norm(x)
    jax.block_until_ready(y)

    y_ref = fixed_norm_ref(x)
    assert y.shape == x.shape and y.dtype == x.dtype
    assert jnp.allclose(y, y_ref, atol=1e-5, rtol=1e-5)

    print("KERNEL_OK")
</pallas_src>

<mosaic_0001>
module attributes {stable_mosaic.version = 11 : i64} {
  func.func @_fixednorm_kernel(%arg0: i32, %arg1: memref<16x32xf32, #tpu.memory_space<vmem>>, %arg2: memref<16x32xf32, #tpu.memory_space<vmem>>) attributes {dimension_semantics = [#tpu.dimension_semantics<parallel>], iteration_bounds = array<i64: 1>, scalar_prefetch = 0 : i64, scratch_operands = 0 : i64, tpu.core_type = #tpu.core_type<tc>, window_params = [{transform_indices = @transform_0, window_bounds = array<i64: 16, 32>}, {transform_indices = @transform_1, window_bounds = array<i64: 16, 32>}]} {
    %c0 = arith.constant 0 : index
    %c0_0 = arith.constant 0 : index
    %0 = vector.load %arg1[%c0, %c0_0] : memref<16x32xf32, #tpu.memory_space<vmem>>, vector<16x32xf32>
    %1 = arith.mulf %0, %0 : vector<16x32xf32>
    %cst = arith.constant dense<0.000000e+00> : vector<16xf32>
    %2 = vector.multi_reduction <add>, %1, %cst [1] : vector<16x32xf32> to vector<16xf32>
    %3 = vector.shape_cast %2 : vector<16xf32> to vector<16x1xf32>
    %4 = math.sqrt %3 : vector<16x1xf32>
    %cst_1 = arith.constant 0.176776692 : f32
    %5 = vector.broadcast %cst_1 : f32 to vector<16x1xf32>
    %6 = arith.mulf %4, %5 : vector<16x1xf32>
    %cst_2 = arith.constant 9.99999996E-13 : f32
    %7 = vector.broadcast %cst_2 : f32 to vector<16x1xf32>
    %8 = arith.addf %6, %7 : vector<16x1xf32>
    %cst_3 = arith.constant 1.000000e+00 : f32
    %9 = vector.broadcast %cst_3 : f32 to vector<16x1xf32>
    %10 = arith.divf %9, %8 : vector<16x1xf32>
    %11 = vector.broadcast %10 : vector<16x1xf32> to vector<16x32xf32>
    %12 = arith.mulf %0, %11 : vector<16x32xf32>
    %c0_4 = arith.constant 0 : index
    %c0_5 = arith.constant 0 : index
    %13 = vector.load %arg2[%c0_4, %c0_5] : memref<16x32xf32, #tpu.memory_space<vmem>>, vector<16x32xf32>
    tpu.vector_store %arg2[%c0_4, %c0_5], %12 {strides = array<i32>} : memref<16x32xf32, #tpu.memory_space<vmem>>, vector<16x32xf32>,
    return
  }
  func.func @transform_0(%arg0: i32) -> (i32, i32) {
    %c0_i32 = arith.constant 0 : i32
    %c0_i32_0 = arith.constant 0 : i32
    return %arg0, %c0_i32 : i32, i32
  }
  func.func @transform_1(%arg0: i32) -> (i32, i32) {
    %c0_i32 = arith.constant 0 : i32
    %c0_i32_0 = arith.constant 0 : i32
    return %arg0, %c0_i32 : i32, i32
  }
}

</mosaic_0001>

<llo_original>
// kernel: tpu_custom_call.1
$region0: #{tpu_custom_call.1}
  #allocation0 [shape = 'u32[]', space=smem, size = 0x4, offset = 0x4, fixed_abs, tag = 'smem constant byte address 0x4 - core index']
  #allocation1 [shape = 'u32[144,128]{1,0:T(1,128)}', space=vmem, size = 0x12000, scoped, tag = 'internal scratch']
  %s0 = inlined_call_operand.hbm [shape: f32[16,32], index: 0, kind: input, shape index: {}]
  %s1 = inlined_call_operand.hbm [shape: f32[16,32], index: 1, kind: output, shape index: {}]
  %s2 = sld [smem:[#allocation0]]
  $region18: #{tpu_custom_call.1} parent=0
    _
  %s4 = ssub.s32 1, %s2
  %s5 = scalar_select 0, %s4, %s2
  $region1: #{tpu_custom_call.1} parent=0
    #allocation2 [shape = 'u8[8192]{0}', space=vmem, size = 0x2000, scoped, tag = 'input window, operand 0, single buffered']
    #allocation3 [shape = 's32[1]{0}', space=sflag, size = 0x4, scoped, tag = 'scoped memory for tpu_custom_call.1']
    #allocation4 [shape = 's32[1]{0}', space=sflag, size = 0x4, scoped, tag = 'scoped memory for tpu_custom_call.1']
    #allocation5 [shape = 'u8[8192]{0}', space=vmem, size = 0x2000, scoped, tag = 'output window, operand 0, single buffered']
    %6 = vsyncpa [#allocation3], 0
    %7 = vsyncpa [#allocation4], 0
    // Predicated region
    $region2: #{tpu_custom_call.1} parent=1 // pred_check
      _
    $region3: #{tpu_custom_call.1} parent=1 // pred_check_branch
      %9 = sbr.rel (0) target = $region5
    $region4: #{tpu_custom_call.1} parent=1 // pred_region
      %s11 = ssub.s32 256, 256
      %12 = vsyncadd [#allocation3], %s11
      %s13 = sshll.u32 [#allocation2], 4
      %s14 = int_to_ptr.vmem [resolvable:$true] %s13
      %19 = dma.hbm_to_vmem [thread:$0]  %s0, 256, %s14, [#allocation3], 128, 128, 8
    $region5: #{tpu_custom_call.1} parent=1 // pred_fallthru
      _
    // Predicated region
    $region6: #{tpu_custom_call.1} parent=1 // pred_check
      _
    $region7: #{tpu_custom_call.1} parent=1 // pred_check_branch
      %21 = sbr.rel (0) target = $region9
    $region8: #{tpu_custom_call.1} parent=1 // pred_region
      %22 = dma.done [#allocation3], 256
    $region9: #{tpu_custom_call.1} parent=1 // pred_fallthru
      _
    %v23 = vld [vmem:[#allocation2] sm:$0xff]
    %v24 = vld [vmem:[#allocation2 + $0x8] sm:$0xff]
    %v25 = vmul.f32 %v23, %v23
    %v26 = vmul.f32 %v24, %v24
    %vm27 = vcmask 261120
    %v28 = vsel %vm27, %v25, 0.0
    %29 = vadd.xlane.f32.xlu0 %v28
    %v30 = vpop.xlane.xlu0 %29
    %v31 = vsel %vm27, %v26, 0.0
    %32 = vadd.xlane.f32.xlu0 %v31
    %v33 = vpop.xlane.xlu0 %32
    %v34 = vrsqrt.pop %v30
    %v35 = vmul.f32 %v30, %v34
    %vm36 = vcmp.eq.f32.partialorder %v30, inf
    %v37 = vsel %vm36, %v30, %v35
    %vm38 = vcmp.eq.f32.partialorder %v30, 0.0
    %v39 = vand.u32 %v30, 2147483648
    %v40 = vsel %vm38, %v39, %v37
    %v41 = vrsqrt.pop %v33
    %v42 = vmul.f32 %v33, %v41
    %vm43 = vcmp.eq.f32.partialorder %v33, inf
    %v44 = vsel %vm43, %v33, %v42
    %vm45 = vcmp.eq.f32.partialorder %v33, 0.0
    %v46 = vand.u32 %v33, 2147483648
    %v47 = vsel %vm45, %v46, %v44
    %v48 = vmul.f32 %v40, 0.17677669
    %v49 = vmul.f32 %v47, 0.17677669
    %v50 = vadd.f32 %v48, 1e-12
    %v51 = vadd.f32 %v49, 1e-12
    %v52 = vrcp.pop %v50
    %v53 = vmul.f32 1.0, %v52
    %v54 = vrcp.pop %v51
    %v55 = vmul.f32 1.0, %v54
    %v56 = vmul.f32 %v23, %v53
    %v57 = vmul.f32 %v24, %v55
    %58 = vst.msk [vmem:[#allocation5] sm:$0xff] %vm27, %v56
    %59 = vst.msk [vmem:[#allocation5 + $0x8] sm:$0xff] %vm27, %v57
    // Predicated region
    $region10: #{tpu_custom_call.1} parent=1 // pred_check
      _
    $region11: #{tpu_custom_call.1} parent=1 // pred_check_branch
      %61 = sbr.rel (0) target = $region13
    $region12: #{tpu_custom_call.1} parent=1 // pred_region
      %s63 = ssub.s32 256, 256
      %64 = vsyncadd [#allocation4], %s63
      %s65 = sshll.u32 [#allocation5], 4
      %s66 = int_to_ptr.vmem [resolvable:$true] %s65
      %71 = dma.vmem_to_hbm [thread:$0]  %s66, 256, %s1, [#allocation4], 128, 128, 8
    $region13: #{tpu_custom_call.1} parent=1 // pred_fallthru
      _
    // Predicated region
    $region14: #{tpu_custom_call.1} parent=1 // pred_check
      _
    $region15: #{tpu_custom_call.1} parent=1 // pred_check_branch
      %73 = sbr.rel (0) target = $region17
    $region16: #{tpu_custom_call.1} parent=1 // pred_region
      %74 = dma.done [#allocation4], 256
    $region17: #{tpu_custom_call.1} parent=1 // pred_fallthru
      _
    %75 = vsyncpa [#allocation3], 1
    %76 = vsyncpa [#allocation4], 1

</llo_original>
